<compile_context>
chip_gen: v7x
topology: tpu7x:2x2x1
jax: 0.10.0
libtpu: 0.0.40
codegen_flags: <defaults>
</compile_context>

<pallas_src>
import functools
import math

import jax
import jax.numpy as jnp
from jax.experimental import pallas as pl
from jax.experimental.pallas import tpu as pltpu


def _round_up(x, m):
    return ((x + m - 1) // m) * m


def _abs_diff_colsum_kernel(ori_ref, adv_ref, out_ref, *, tb, tl, rows, ragged):
    """Per-block partial column sums of |ori - adv|.

    ori_ref / adv_ref: (tb, tl) native dtype.
    out_ref:           (1, 8, tl) f32 partial sums (sublane fold only).
    """
    i = pl.program_id(0)
    ngroups = tb // 8

    def body(g, acc):
        r0 = pl.multiple_of(g * 8, 8)
        o = ori_ref[pl.ds(r0, 8), :].astype(jnp.float32)
        a = adv_ref[pl.ds(r0, 8), :].astype(jnp.float32)
        d = jnp.abs(o - a)
        if ragged:
            # Rows past the end of the (unpadded) input hold unspecified data
            # in the overhanging block -> zero their contribution.
            rid = i * tb + r0 + jax.lax.broadcasted_iota(jnp.int32, (8, tl), 0)
            d = jnp.where(rid < rows, d, 0.0)
        return acc + d

    acc = jax.lax.fori_loop(0, ngroups, body,
                            jnp.zeros((8, tl), jnp.float32),
                            unroll=min(ngroups, 8))
    out_ref[...] = acc[None, :, :]


def weighted_dct_dis(ori_dct, adv_dct, qt, *, weight_type='log',
                     epsilon=0.001, alpha=0.1):
    """Pallas TPU implementation of WeightedDCTDis.forward.

    ori_dct, adv_dct: [B, C, H, W] (NCHW, any float dtype)
    qt:               [H, W]
    returns scalar float32 loss.
    """
    B, C, H, W = ori_dct.shape
    assert adv_dct.shape == ori_dct.shape
    assert qt.shape == (H, W)
    HW = H * W
    N = B * C

    # ---- weight matrix (tiny; plain JAX). Because it only depends on the
    #      column, it is applied to the kernel's per-column |diff| sums AFTER
    #      the kernel -> the hot loop does zero multiplies and streams only
    #      the two big tensors. ----
    qt32 = qt.astype(jnp.float32)
    if weight_type == 'log':
        w = 1.0 / jnp.log(qt32 + epsilon)
    elif weight_type == 'exp':
        w = jnp.exp(-alpha * qt32)
    else:
        raise ValueError("Unsupported weight_type. Use 'log' or 'exp'.")
    w = (w / jnp.max(w)).reshape(HW)

    # ---- lane-dense layout: fold rows into the lane axis when HW is not a
    #      multiple of 128 (contiguous reshape, free) ----
    fold = 1
    if HW % 128 != 0:
        base = 128 // math.gcd(HW, 128)
        if N % base == 0:
            fold = base
            while fold * 2 * HW <= 1024 and N % (fold * 2) == 0:
                fold *= 2
    rows = N // fold
    width = HW * fold

    ori = ori_dct.reshape(rows, width)   # native dtype; upcast happens in-kernel
    adv = adv_dct.reshape(rows, width)

    # ---- lane tiling (bounds VMEM for very large H*W) ----
    max_tl = 4096
    if width % 128 == 0 and width > max_tl:
        tl = 128
        for cand in range(max_tl, 127, -128):
            if width % cand == 0:
                tl = cand
                break
    else:
        tl = width
    grid_l = width // tl

    # ---- row tiling: ~4 MiB per input per pipeline buffer. With default
    #      double-buffering that is ~16-17 MiB of VMEM -> fits v5e/v6e/v7x.
    #      Cap tb so there are >= ~4 row-blocks (megacore + pipeline overlap).
    itemsize = jnp.dtype(ori.dtype).itemsize
    target_block_bytes = 4 * 1024 * 1024
    tb = max(8, (target_block_bytes // (tl * itemsize)) // 8 * 8)
    tb = min(tb, max(8, _round_up(pl.cdiv(rows, 4), 8)))
    assert tb % 8 == 0
    grid_r = pl.cdiv(rows, tb)
    ragged = (rows % tb) != 0

    kernel = functools.partial(_abs_diff_colsum_kernel,
                               tb=tb, tl=tl, rows=rows, ragged=ragged)

    partials = pl.pallas_call(
        kernel,
        out_shape=jax.ShapeDtypeStruct((grid_r, 8, width), jnp.float32),
        grid_spec=pltpu.PrefetchScalarGridSpec(
            num_scalar_prefetch=0,
            grid=(grid_r, grid_l),
            in_specs=[
                pl.BlockSpec((tb, tl), lambda i, j: (i, j)),
                pl.BlockSpec((tb, tl), lambda i, j: (i, j)),
            ],
            out_specs=pl.BlockSpec((1, 8, tl), lambda i, j: (i, 0, j)),
        ),
        compiler_params=pltpu.CompilerParams(
            dimension_semantics=("parallel", "parallel"),
            vmem_limit_bytes=48 * 1024 * 1024,
        ),
    )(ori, adv)

    # ---- tiny final reduction + weighting (outside the kernel) ----
    col_sums = jnp.sum(partials, axis=(0, 1))            # (width,)
    w_eff = jnp.tile(w, fold) if fold > 1 else w         # (width,)
    return jnp.sum(col_sums * w_eff)


def _reference(ori_dct, adv_dct, qt, weight_type='log', epsilon=0.001, alpha=0.1):
    qt = qt.astype(jnp.float32)
    if weight_type == 'log':
        w = 1.0 / jnp.log(qt + epsilon)
    else:
        w = jnp.exp(-alpha * qt)
    w = w / jnp.max(w)
    return jnp.sum(w * jnp.abs(ori_dct.astype(jnp.float32) - adv_dct.astype(jnp.float32)))


if __name__ == "__main__":
    key = jax.random.PRNGKey(0)
    k1, k2, k3, k4, k5 = jax.random.split(key, 5)

    # primary shapes (NCHW); HW = 256 is lane-dense
    B, C, H, W = 2, 4, 16, 16
    ori = jax.random.normal(k1, (B, C, H, W), dtype=jnp.float32) * 10.0
    adv = ori + jax.random.normal(k2, (B, C, H, W), dtype=jnp.float32)
    # synthetic quantization table, values in [2, 100]
    qt = jax.random.uniform(k3, (H, W), dtype=jnp.float32, minval=2.0, maxval=100.0)

    for wt in ("log", "exp"):
        loss = jax.block_until_ready(weighted_dct_dis(ori, adv, qt, weight_type=wt))
        ref = _reference(ori, adv, qt, weight_type=wt)
        assert jnp.allclose(loss, ref, rtol=1e-4, atol=1e-4), (wt, loss, ref)

    # ragged row-count: exercises the in-kernel tail masking (no jnp.pad copy)
    B2, C2 = 3, 5
    ori2 = jax.random.normal(k4, (B2, C2, H, W), dtype=jnp.float32) * 10.0
    adv2 = ori2 + jax.random.normal(k5, (B2, C2, H, W), dtype=jnp.float32)
    loss2 = jax.block_until_ready(weighted_dct_dis(ori2, adv2, qt, weight_type='log'))
    ref2 = _reference(ori2, adv2, qt, weight_type='log')
    assert jnp.allclose(loss2, ref2, rtol=1e-4, atol=1e-4), (loss2, ref2)

    print("KERNEL_OK")
</pallas_src>

<mosaic_0001>
module attributes {stable_mosaic.version = 11 : i64} {
  func.func @_abs_diff_colsum_kernel(%arg0: i32, %arg1: i32, %arg2: memref<8x256xf32, #tpu.memory_space<vmem>>, %arg3: memref<8x256xf32, #tpu.memory_space<vmem>>, %arg4: memref<1x8x256xf32, #tpu.memory_space<vmem>>) attributes {dimension_semantics = [#tpu.dimension_semantics<parallel>, #tpu.dimension_semantics<parallel>], iteration_bounds = array<i64: 1, 1>, scalar_prefetch = 0 : i64, scratch_operands = 0 : i64, tpu.core_type = #tpu.core_type<tc>, window_params = [{transform_indices = @transform_0, window_bounds = array<i64: 8, 256>}, {transform_indices = @transform_1, window_bounds = array<i64: 8, 256>}, {transform_indices = @transform_2, window_bounds = array<i64: 1, 8, 256>}]} {
    %cst = arith.constant 0.000000e+00 : f32
    %0 = vector.broadcast %cst : f32 to vector<8x256xf32>
    %c0_i32 = arith.constant 0 : i32
    %c8_i32 = arith.constant 8 : i32
    %1 = arith.muli %c0_i32, %c8_i32 : i32
    %2 = tpu.assume_multiple %1, 8 : i32
    %3 = arith.index_cast %2 : i32 to index
    %c0 = arith.constant 0 : index
    %4 = vector.load %arg2[%3, %c0] : memref<8x256xf32, #tpu.memory_space<vmem>>, vector<8x256xf32>
    %5 = arith.index_cast %2 : i32 to index
    %c0_0 = arith.constant 0 : index
    %6 = vector.load %arg3[%5, %c0_0] : memref<8x256xf32, #tpu.memory_space<vmem>>, vector<8x256xf32>
    %7 = arith.subf %4, %6 : vector<8x256xf32>
    %8 = math.absf %7 : vector<8x256xf32>
    %9 = arith.addf %0, %8 : vector<8x256xf32>
    %c1_i32 = arith.constant 1 : i32
    %10 = vector.shape_cast %9 : vector<8x256xf32> to vector<1x8x256xf32>
    %c0_1 = arith.constant 0 : index
    %c0_2 = arith.constant 0 : index
    %c0_3 = arith.constant 0 : index
    %11 = vector.load %arg4[%c0_1, %c0_2, %c0_3] : memref<1x8x256xf32, #tpu.memory_space<vmem>>, vector<1x8x256xf32>
    tpu.vector_store %arg4[%c0_1, %c0_2, %c0_3], %10 {strides = array<i32>} : memref<1x8x256xf32, #tpu.memory_space<vmem>>, vector<1x8x256xf32>,
    return
  }
  func.func @transform_0(%arg0: i32, %arg1: i32) -> (i32, i32) {
    %c0_i32 = arith.constant 0 : i32
    return %arg0, %arg1 : i32, i32
  }
  func.func @transform_1(%arg0: i32, %arg1: i32) -> (i32, i32) {
    %c0_i32 = arith.constant 0 : i32
    return %arg0, %arg1 : i32, i32
  }
  func.func @transform_2(%arg0: i32, %arg1: i32) -> (i32, i32, i32) {
    %c0_i32 = arith.constant 0 : i32
    %c0_i32_0 = arith.constant 0 : i32
    return %arg0, %c0_i32, %arg1 : i32, i32, i32
  }
}

</mosaic_0001>

<llo_original>
// kernel: tpu_custom_call.1
$region0: #{tpu_custom_call.1}
  #allocation0 [shape = 'u32[]', space=smem, size = 0x4, offset = 0x4, fixed_abs, tag = 'smem constant byte address 0x4 - core index']
  #allocation1 [shape = 'u32[144,128]{1,0:T(1,128)}', space=vmem, size = 0x12000, scoped, tag = 'internal scratch']
  %s0 = inlined_call_operand.hbm [shape: f32[8,256], index: 0, kind: input, shape index: {}]
  %s1 = inlined_call_operand.hbm [shape: f32[8,256], index: 1, kind: input, shape index: {}]
  %s2 = inlined_call_operand.hbm [shape: f32[1,8,256], index: 2, kind: output, shape index: {}]
  %s3 = sld [smem:[#allocation0]]
  $region26: #{tpu_custom_call.1} parent=0
    _
  %s5 = ssub.s32 1, %s3
  %s6 = scalar_select 0, %s5, %s3
  $region1: #{tpu_custom_call.1} parent=0
    #allocation2 [shape = 'u8[8192]{0}', space=vmem, size = 0x2000, scoped, tag = 'input window, operand 0, single buffered']
    #allocation3 [shape = 's32[1]{0}', space=sflag, size = 0x4, scoped, tag = 'scoped memory for tpu_custom_call.1']
    #allocation4 [shape = 's32[1]{0}', space=sflag, size = 0x4, scoped, tag = 'scoped memory for tpu_custom_call.1']
    #allocation5 [shape = 'u8[8192]{0}', space=vmem, size = 0x2000, scoped, tag = 'input window, operand 1, single buffered']
    #allocation6 [shape = 's32[1]{0}', space=sflag, size = 0x4, scoped, tag = 'scoped memory for tpu_custom_call.1']
    #allocation7 [shape = 'u8[8192]{0}', space=vmem, size = 0x2000, scoped, tag = 'output window, operand 0, single buffered']
    %7 = vsyncpa [#allocation3], 0
    %8 = vsyncpa [#allocation6], 0
    %9 = vsyncpa [#allocation4], 0
    // Predicated region
    $region2: #{tpu_custom_call.1} parent=1 // pred_check
      _
    $region3: #{tpu_custom_call.1} parent=1 // pred_check_branch
      %11 = sbr.rel (0) target = $region5
    $region4: #{tpu_custom_call.1} parent=1 // pred_region
      %s13 = ssub.s32 256, 256
      %14 = vsyncadd [#allocation3], %s13
      %s16 = sshll.u32 [#allocation2], 4
      %s17 = int_to_ptr.vmem [resolvable:$true] %s16
      %19 = dma.hbm_to_vmem [thread:$0]  %s0, 256, %s17, [#allocation3]
    $region5: #{tpu_custom_call.1} parent=1 // pred_fallthru
      _
    // Predicated region
    $region6: #{tpu_custom_call.1} parent=1 // pred_check
      _
    $region7: #{tpu_custom_call.1} parent=1 // pred_check_branch
      %21 = sbr.rel (0) target = $region9
    $region8: #{tpu_custom_call.1} parent=1 // pred_region
      %s23 = ssub.s32 256, 256
      %24 = vsyncadd [#allocation6], %s23
      %s26 = sshll.u32 [#allocation5], 4
      %s27 = int_to_ptr.vmem [resolvable:$true] %s26
      %29 = dma.hbm_to_vmem [thread:$0]  %s1, 256, %s27, [#allocation6]
    $region9: #{tpu_custom_call.1} parent=1 // pred_fallthru
      _
    // Predicated region
    $region10: #{tpu_custom_call.1} parent=1 // pred_check
      _
    $region11: #{tpu_custom_call.1} parent=1 // pred_check_branch
      %31 = sbr.rel (0) target = $region13
    $region12: #{tpu_custom_call.1} parent=1 // pred_region
      %32 = dma.done [#allocation3], 256
    $region13: #{tpu_custom_call.1} parent=1 // pred_fallthru
      _
    // Predicated region
    $region14: #{tpu_custom_call.1} parent=1 // pred_check
      _
    $region15: #{tpu_custom_call.1} parent=1 // pred_check_branch
      %34 = sbr.rel (0) target = $region17
    $region16: #{tpu_custom_call.1} parent=1 // pred_region
      %35 = dma.done [#allocation6], 256
    $region17: #{tpu_custom_call.1} parent=1 // pred_fallthru
      _
    %s36 = smul.u32 0, 2
    %s37 = smul.addr %s36, 8
    %s38 = scalar_lea.vmem [#allocation2], %s37
    %v39 = vld [vmem:[%s38] sm:$0xff]
    %v40 = vld [vmem:[%s38 + $0x8] sm:$0xff]
    %s41 = smul.addr %s36, 8
    %s42 = scalar_lea.vmem [#allocation5], %s41
    %v43 = vld [vmem:[%s42] sm:$0xff]
    %v44 = vld [vmem:[%s42 + $0x8] sm:$0xff]
    %v45 = vsub.f32 %v39, %v43
    %v46 = vsub.f32 %v40, %v44
    %v47 = vand.u32 2147483647, %v45
    %v48 = vand.u32 2147483647, %v46
    %v49 = vadd.f32 %v47, 0.0
    %v50 = vadd.f32 %v48, 0.0
    %51 = vst [vmem:[#allocation7] sm:$0xff] %v49
    %52 = vst [vmem:[#allocation7 + $0x8] sm:$0xff] %v50
    // Predicated region
    $region18: #{tpu_custom_call.1} parent=1 // pred_check
      _
    $region19: #{tpu_custom_call.1} parent=1 // pred_check_branch
      %54 = sbr.rel (0) target = $region21
    $region20: #{tpu_custom_call.1} parent=1 // pred_region
      %s56 = ssub.s32 256, 256
      %57 = vsyncadd [#allocation4], %s56
      %s59 = sshll.u32 [#allocation7], 4
      %s60 = int_to_ptr.vmem [resolvable:$true] %s59
      %62 = dma.vmem_to_hbm [thread:$0]  %s60, 256, %s2, [#allocation4]
    $region21: #{tpu_custom_call.1} parent=1 // pred_fallthru
      _
    // Predicated region
    $region22: #{tpu_custom_call.1} parent=1 // pred_check
      _
    $region23: #{tpu_custom_call.1} parent=1 // pred_check_branch
      %64 = sbr.rel (0) target = $region25
    $region24: #{tpu_custom_call.1} parent=1 // pred_region
      %65 = dma.done [#allocation4], 256
    $region25: #{tpu_custom_call.1} parent=1 // pred_fallthru
      _
    %66 = vsyncpa [#allocation3], 1
    %67 = vsyncpa [#allocation6], 1
    %68 = vsyncpa [#allocation4], 1

</llo_original>
